<compile_context>
chip_gen: v7x
topology: tpu7x:2x2x1
jax: 0.10.0
libtpu: 0.0.40
codegen_flags: <defaults>
</compile_context>

<pallas_src>
import numpy as np
import jax
import jax.numpy as jnp
from jax.experimental import pallas as pl
from jax.experimental.pallas import tpu as pltpu

# --- static problem structure ---------------------------------------------------------------
K = 4                     # LUT width: weighted fan-in sum lands in [0, K)
NUM_LEVELS = 3            # propagation levels (topological levels 1..3; level 0 = inputs)
NODES_PER_LEVEL = 8       # levelized layout: 8-row-aligned level blocks (no masked stores)
NUM_NODES = (NUM_LEVELS + 1) * NODES_PER_LEVEL          # 32 nodes total
LEVEL_ROWS = tuple((lvl * NODES_PER_LEVEL, NODES_PER_LEVEL)
                   for lvl in range(1, NUM_LEVELS + 1))  # ((8,8), (16,8), (24,8))

F_TOTAL = 2048            # parallel-simulation lanes per dispatch (amortizes fixed overhead)
F_CHUNK = 512             # lanes per grid step; lane-dense (multiple of 128) output stores


def _gpusim_kernel(a_ref, t_ref, x_ref, o_ref):
    """One F-chunk: propagate all topological levels, statically unrolled."""
    # Seed the output block with the input feature: primary-input rows (level 0) keep their
    # values; gate rows are overwritten level by level below.
    o_ref[...] = x_ref[...]

    for lo, rows in LEVEL_ROWS:          # static unroll: tiny, fixed trip count
        h = o_ref[...]                   # (N, Fc) current node values (earlier levels done)
        # msg + reduce restricted to this level's rows:
        #   m[d, f] = sum_s A[lo+d, s] * h[s, f]     with A[dst, src] = 2**(edge_x - 1)
        a_lvl = a_ref[pl.ds(lo, rows), :].astype(jnp.bfloat16)        # (rows, N) exact ints
        m = jnp.dot(a_lvl, h.astype(jnp.bfloat16),
                    preferred_element_type=jnp.float32)               # (rows, Fc) f32
        # node apply via bit-extract LUT:
        #   out[d, f] = activation[cell_type[lo+d], clip(int(m), 0, K-1)]
        #             = (t[lo+d] >> clip(int(m), 0, K-1)) & 1
        idx = jnp.clip(m.astype(jnp.int32), 0, K - 1)                 # (rows, Fc) int32
        t = t_ref[pl.ds(lo, rows), :]                                 # (rows, 1) packed LUT
        bit = (t >> idx) & 1
        o_ref[pl.ds(lo, rows), :] = bit.astype(o_ref.dtype)           # aligned 8-row store


def entire_net_forward(a, tbits, feature):
    """EntireNet.forward(g, feature) with the graph baked into (a, tbits)."""
    n, f_total = feature.shape
    assert f_total % F_CHUNK == 0
    return pl.pallas_call(
        _gpusim_kernel,
        out_shape=jax.ShapeDtypeStruct((n, f_total), jnp.float32),
        grid_spec=pltpu.PrefetchScalarGridSpec(
            num_scalar_prefetch=0,
            grid=(f_total // F_CHUNK,),
            in_specs=[
                pl.BlockSpec((n, n), lambda j: (0, 0)),         # A: VMEM-resident
                pl.BlockSpec((n, 1), lambda j: (0, 0)),         # packed LUTs: VMEM-resident
                pl.BlockSpec((n, F_CHUNK), lambda j: (0, j)),   # feature chunk streams
            ],
            out_specs=pl.BlockSpec((n, F_CHUNK), lambda j: (0, j)),
        ),
        # F-chunks are independent -> "parallel": v7x shards them across both TensorCores.
        compiler_params=pltpu.CompilerParams(dimension_semantics=("parallel",)),
        input_output_aliases={2: 0},      # feature HBM buffer is reused as the output
    )(a, tbits, feature)


def pack_truth_tables(act_per_node):
    """Pack each node's K-entry binary truth table into one int32 bit-LUT."""
    assert np.all((act_per_node == 0.0) | (act_per_node == 1.0)), \
        "bit-extract LUT apply requires a binary activation table"
    weights = (1 << np.arange(K)).astype(np.int64)
    t = (act_per_node.astype(np.int64) * weights).sum(axis=1).astype(np.int32)
    return t.reshape(-1, 1)


def _reference(A, act_per_node, node_level, feature):
    """Pure-numpy re-implementation of the DGL level-by-level propagation semantics."""
    h = np.array(feature, dtype=np.float32)
    for level in range(1, NUM_LEVELS + 1):
        rows = np.flatnonzero(node_level == level)
        m = A[rows] @ h                                            # msg + reduce
        idx = np.clip(m.astype(np.int64), 0, K - 1)
        h[rows] = np.take_along_axis(act_per_node[rows], idx, axis=1)   # activation[ct, h]
    return h


if __name__ == "__main__":
    # Binary truth tables indexed by the weighted fan-in sum s = in0 + 2*in1:
    activation = np.array([[0, 0, 0, 1],   # AND
                           [0, 1, 1, 1],   # OR
                           [0, 1, 1, 0],   # XOR
                           [1, 1, 1, 0]],  # NAND
                          dtype=np.float32)

    # Deterministic synthetic levelized DAG: 8 primary inputs + 3 levels of 8 two-input gates.
    node_level = np.zeros((NUM_NODES,), dtype=np.int32)
    edges = []                            # (src, dst, x) with x in {1, 2} -> weight 2**(x-1)
    for level in range(1, NUM_LEVELS + 1):
        prev, base = (level - 1) * NODES_PER_LEVEL, level * NODES_PER_LEVEL
        for g in range(NODES_PER_LEVEL):
            dst = base + g
            node_level[dst] = level
            edges.append((prev + g, dst, 1))
            edges.append((prev + (g + 3) % NODES_PER_LEVEL, dst, 2))
    A_np = np.zeros((NUM_NODES, NUM_NODES), dtype=np.float32)
    for src, dst, x in edges:
        A_np[dst, src] = float(2 ** (x - 1))

    cell_type = np.arange(NUM_NODES, dtype=np.int32) % 4
    act_per_node_np = activation[cell_type]               # (N, K) per-node LUT rows
    act_per_node_np[node_level == 0] = 0.0                # inputs' tables are never used

    tbits_np = pack_truth_tables(act_per_node_np)         # (N, 1) int32 bit-packed LUTs

    # Deterministic 0/1 input features: F_TOTAL parallel simulation vectors.
    key = jax.random.PRNGKey(0)
    feature = jax.random.bernoulli(
        key, p=0.5, shape=(NUM_NODES, F_TOTAL)).astype(jnp.float32)
    # Snapshot BEFORE the kernel call: the feature buffer is aliased to the output.
    feature_np = np.asarray(feature).copy()

    out = entire_net_forward(jnp.asarray(A_np), jnp.asarray(tbits_np), feature)
    out = jax.block_until_ready(out)

    ref = _reference(A_np, act_per_node_np, node_level, feature_np)
    if not np.array_equal(np.asarray(out), ref):
        raise AssertionError("Pallas kernel output does not match reference")

    print("KERNEL_OK")
</pallas_src>

<mosaic_0001>
module attributes {stable_mosaic.version = 11 : i64} {
  func.func @_gpusim_kernel(%arg0: i32, %arg1: memref<32x32xf32, #tpu.memory_space<vmem>>, %arg2: memref<32x1xi32, #tpu.memory_space<vmem>>, %arg3: memref<32x512xf32, #tpu.memory_space<vmem>>, %arg4: memref<32x512xf32, #tpu.memory_space<vmem>>) attributes {dimension_semantics = [#tpu.dimension_semantics<parallel>], iteration_bounds = array<i64: 4>, scalar_prefetch = 0 : i64, scratch_operands = 0 : i64, tpu.core_type = #tpu.core_type<tc>, window_params = [{pipeline_mode = #tpu.pipeline_mode<synchronous>, transform_indices = @transform_0, window_bounds = array<i64: 32, 32>}, {pipeline_mode = #tpu.pipeline_mode<synchronous>, transform_indices = @transform_1, window_bounds = array<i64: 32, 1>}, {transform_indices = @transform_2, window_bounds = array<i64: 32, 512>}, {transform_indices = @transform_3, window_bounds = array<i64: 32, 512>}]} {
    %c0 = arith.constant 0 : index
    %c0_0 = arith.constant 0 : index
    %0 = vector.load %arg3[%c0, %c0_0] : memref<32x512xf32, #tpu.memory_space<vmem>>, vector<32x512xf32>
    %c0_1 = arith.constant 0 : index
    %c0_2 = arith.constant 0 : index
    %1 = vector.load %arg4[%c0_1, %c0_2] : memref<32x512xf32, #tpu.memory_space<vmem>>, vector<32x512xf32>
    tpu.vector_store %arg4[%c0_1, %c0_2], %0 {strides = array<i32>} : memref<32x512xf32, #tpu.memory_space<vmem>>, vector<32x512xf32>,
    %c0_3 = arith.constant 0 : index
    %c0_4 = arith.constant 0 : index
    %2 = vector.load %arg4[%c0_3, %c0_4] : memref<32x512xf32, #tpu.memory_space<vmem>>, vector<32x512xf32>
    %c8 = arith.constant 8 : index
    %c0_5 = arith.constant 0 : index
    %3 = vector.load %arg1[%c8, %c0_5] : memref<32x32xf32, #tpu.memory_space<vmem>>, vector<8x32xf32>
    %4 = arith.truncf %3 : vector<8x32xf32> to vector<8x32xbf16>
    %5 = arith.truncf %2 : vector<32x512xf32> to vector<32x512xbf16>
    %cst = arith.constant dense<0.000000e+00> : vector<8x512xf32>
    %6 = tpu.matmul %4, %5, %cst {dimension_numbers = #tpu.dot_dimension_numbers<[1], [0], [0], [1], [0, 0, 1, 1], [], []>} : vector<8x32xbf16>, vector<32x512xbf16>, vector<8x512xf32> -> vector<8x512xf32>
    %7 = arith.fptosi %6 : vector<8x512xf32> to vector<8x512xi32>
    %c0_i32 = arith.constant 0 : i32
    %c3_i32 = arith.constant 3 : i32
    %8 = vector.broadcast %c0_i32 : i32 to vector<8x512xi32>
    %9 = arith.maxsi %8, %7 : vector<8x512xi32>
    %10 = vector.broadcast %c3_i32 : i32 to vector<8x512xi32>
    %11 = arith.minsi %10, %9 : vector<8x512xi32>
    %c8_6 = arith.constant 8 : index
    %c0_7 = arith.constant 0 : index
    %12 = vector.load %arg2[%c8_6, %c0_7] : memref<32x1xi32, #tpu.memory_space<vmem>>, vector<8x1xi32>
    %13 = vector.broadcast %12 : vector<8x1xi32> to vector<8x512xi32>
    %14 = arith.shrsi %13, %11 : vector<8x512xi32>
    %c1_i32 = arith.constant 1 : i32
    %15 = vector.broadcast %c1_i32 : i32 to vector<8x512xi32>
    %16 = arith.andi %14, %15 : vector<8x512xi32>
    %17 = arith.sitofp %16 : vector<8x512xi32> to vector<8x512xf32>
    %c8_8 = arith.constant 8 : index
    %c0_9 = arith.constant 0 : index
    %18 = vector.load %arg4[%c8_8, %c0_9] : memref<32x512xf32, #tpu.memory_space<vmem>>, vector<8x512xf32>
    tpu.vector_store %arg4[%c8_8, %c0_9], %17 {strides = array<i32>} : memref<32x512xf32, #tpu.memory_space<vmem>>, vector<8x512xf32>,
    %c0_10 = arith.constant 0 : index
    %c0_11 = arith.constant 0 : index
    %19 = vector.load %arg4[%c0_10, %c0_11] : memref<32x512xf32, #tpu.memory_space<vmem>>, vector<32x512xf32>
    %c16 = arith.constant 16 : index
    %c0_12 = arith.constant 0 : index
    %20 = vector.load %arg1[%c16, %c0_12] : memref<32x32xf32, #tpu.memory_space<vmem>>, vector<8x32xf32>
    %21 = arith.truncf %20 : vector<8x32xf32> to vector<8x32xbf16>
    %22 = arith.truncf %19 : vector<32x512xf32> to vector<32x512xbf16>
    %cst_13 = arith.constant dense<0.000000e+00> : vector<8x512xf32>
    %23 = tpu.matmul %21, %22, %cst_13 {dimension_numbers = #tpu.dot_dimension_numbers<[1], [0], [0], [1], [0, 0, 1, 1], [], []>} : vector<8x32xbf16>, vector<32x512xbf16>, vector<8x512xf32> -> vector<8x512xf32>
    %24 = arith.fptosi %23 : vector<8x512xf32> to vector<8x512xi32>
    %c0_i32_14 = arith.constant 0 : i32
    %c3_i32_15 = arith.constant 3 : i32
    %25 = vector.broadcast %c0_i32_14 : i32 to vector<8x512xi32>
    %26 = arith.maxsi %25, %24 : vector<8x512xi32>
    %27 = vector.broadcast %c3_i32_15 : i32 to vector<8x512xi32>
    %28 = arith.minsi %27, %26 : vector<8x512xi32>
    %c16_16 = arith.constant 16 : index
    %c0_17 = arith.constant 0 : index
    %29 = vector.load %arg2[%c16_16, %c0_17] : memref<32x1xi32, #tpu.memory_space<vmem>>, vector<8x1xi32>
    %30 = vector.broadcast %29 : vector<8x1xi32> to vector<8x512xi32>
    %31 = arith.shrsi %30, %28 : vector<8x512xi32>
    %c1_i32_18 = arith.constant 1 : i32
    %32 = vector.broadcast %c1_i32_18 : i32 to vector<8x512xi32>
    %33 = arith.andi %31, %32 : vector<8x512xi32>
    %34 = arith.sitofp %33 : vector<8x512xi32> to vector<8x512xf32>
    %c16_19 = arith.constant 16 : index
    %c0_20 = arith.constant 0 : index
    %35 = vector.load %arg4[%c16_19, %c0_20] : memref<32x512xf32, #tpu.memory_space<vmem>>, vector<8x512xf32>
    tpu.vector_store %arg4[%c16_19, %c0_20], %34 {strides = array<i32>} : memref<32x512xf32, #tpu.memory_space<vmem>>, vector<8x512xf32>,
    %c0_21 = arith.constant 0 : index
    %c0_22 = arith.constant 0 : index
    %36 = vector.load %arg4[%c0_21, %c0_22] : memref<32x512xf32, #tpu.memory_space<vmem>>, vector<32x512xf32>
    %c24 = arith.constant 24 : index
    %c0_23 = arith.constant 0 : index
    %37 = vector.load %arg1[%c24, %c0_23] : memref<32x32xf32, #tpu.memory_space<vmem>>, vector<8x32xf32>
    %38 = arith.truncf %37 : vector<8x32xf32> to vector<8x32xbf16>
    %39 = arith.truncf %36 : vector<32x512xf32> to vector<32x512xbf16>
    %cst_24 = arith.constant dense<0.000000e+00> : vector<8x512xf32>
    %40 = tpu.matmul %38, %39, %cst_24 {dimension_numbers = #tpu.dot_dimension_numbers<[1], [0], [0], [1], [0, 0, 1, 1], [], []>} : vector<8x32xbf16>, vector<32x512xbf16>, vector<8x512xf32> -> vector<8x512xf32>
    %41 = arith.fptosi %40 : vector<8x512xf32> to vector<8x512xi32>
    %c0_i32_25 = arith.constant 0 : i32
    %c3_i32_26 = arith.constant 3 : i32
    %42 = vector.broadcast %c0_i32_25 : i32 to vector<8x512xi32>
    %43 = arith.maxsi %42, %41 : vector<8x512xi32>
    %44 = vector.broadcast %c3_i32_26 : i32 to vector<8x512xi32>
    %45 = arith.minsi %44, %43 : vector<8x512xi32>
    %c24_27 = arith.constant 24 : index
    %c0_28 = arith.constant 0 : index
    %46 = vector.load %arg2[%c24_27, %c0_28] : memref<32x1xi32, #tpu.memory_space<vmem>>, vector<8x1xi32>
    %47 = vector.broadcast %46 : vector<8x1xi32> to vector<8x512xi32>
    %48 = arith.shrsi %47, %45 : vector<8x512xi32>
    %c1_i32_29 = arith.constant 1 : i32
    %49 = vector.broadcast %c1_i32_29 : i32 to vector<8x512xi32>
    %50 = arith.andi %48, %49 : vector<8x512xi32>
    %51 = arith.sitofp %50 : vector<8x512xi32> to vector<8x512xf32>
    %c24_30 = arith.constant 24 : index
    %c0_31 = arith.constant 0 : index
    %52 = vector.load %arg4[%c24_30, %c0_31] : memref<32x512xf32, #tpu.memory_space<vmem>>, vector<8x512xf32>
    tpu.vector_store %arg4[%c24_30, %c0_31], %51 {strides = array<i32>} : memref<32x512xf32, #tpu.memory_space<vmem>>, vector<8x512xf32>,
    return
  }
  func.func @transform_0(%arg0: i32) -> (i32, i32) {
    %c0_i32 = arith.constant 0 : i32
    %c0_i32_0 = arith.constant 0 : i32
    %c0_i32_1 = arith.constant 0 : i32
    return %c0_i32, %c0_i32_0 : i32, i32
  }
  func.func @transform_1(%arg0: i32) -> (i32, i32) {
    %c0_i32 = arith.constant 0 : i32
    %c0_i32_0 = arith.constant 0 : i32
    %c0_i32_1 = arith.constant 0 : i32
    return %c0_i32, %c0_i32_0 : i32, i32
  }
  func.func @transform_2(%arg0: i32) -> (i32, i32) {
    %c0_i32 = arith.constant 0 : i32
    %c0_i32_0 = arith.constant 0 : i32
    return %c0_i32, %arg0 : i32, i32
  }
  func.func @transform_3(%arg0: i32) -> (i32, i32) {
    %c0_i32 = arith.constant 0 : i32
    %c0_i32_0 = arith.constant 0 : i32
    return %c0_i32, %arg0 : i32, i32
  }
}

</mosaic_0001>

<llo_original>
// kernel: tpu_custom_call.1
$region0: #{tpu_custom_call.1}
  #allocation0 [shape = 'u32[]', space=smem, size = 0x4, offset = 0x4, fixed_abs, tag = 'smem constant byte address 0x4 - core index']
  #allocation1 [shape = 'u32[144,128]{1,0:T(1,128)}', space=vmem, size = 0x12000, scoped, tag = 'internal scratch']
  %s0 = inlined_call_operand.vmem [shape: f32[32,32], index: 0, kind: input, shape index: {}]
  %s1 = inlined_call_operand.vmem [shape: s32[32,1], index: 1, kind: input, shape index: {}]
  %s2 = inlined_call_operand.hbm [shape: f32[32,2048], index: 2, kind: input, shape index: {}, may-alias: {2,3}]
  %s3 = inlined_call_operand.hbm [shape: f32[32,2048], index: 3, kind: output, shape index: {}, may-alias: {2,3}]
  %s4 = sld [smem:[#allocation0]]
  $region49: #{tpu_custom_call.1} parent=0
    _
  %s6 = ssub.s32 1, %s4
  %s7 = scalar_select 0, %s6, %s4
  $region1: #{tpu_custom_call.1} parent=0
    #allocation2 [shape = 'u8[131072]{0}', space=vmem, size = 0x20000, scoped, tag = 'input window, operand 2']
    #allocation3 [shape = 's32[2]{0}', space=sflag, size = 0x8, scoped, tag = 'scoped memory for tpu_custom_call.1']
    #allocation4 [shape = 's32[2]{0}', space=sflag, size = 0x8, scoped, tag = 'scoped memory for tpu_custom_call.1']
    #allocation5 [shape = 'u8[131072]{0}', space=vmem, size = 0x20000, scoped, tag = 'output window, operand 0']
    %8 = vsyncpa [#allocation3], 0
    %s9 = scalar_lea.sflag [#allocation3], 1
    %10 = vsyncpa %s9, 0
    %11 = vsyncpa [#allocation4], 0
    %s12 = scalar_lea.sflag [#allocation4], 1
    %13 = vsyncpa %s12, 0
    loop: start=0, step=1, limit=6
    $region2: #{tpu_custom_call.1} parent=1 // loop_pre_header
      _
    $region3: #{tpu_custom_call.1} parent=1 // loop_header
      %s15 = sphi 0, %s19
      %p16 = scmp.ge.s32.totalorder %s15, 6
      %s23 = sphi 0, %s23
      %s25 = sphi 0, %s23
      %s26 = sphi 0, %s25
      %s40 = sphi 0, %s26
      %s44 = sphi 0, %s44
      %s46 = sphi 0, %s44
      %s47 = sphi 0, %s46
      %s61 = sphi 0, %s47
      %s67 = sphi 0, %s69
      %s70 = sphi 0, %s67
      %s71 = sphi 0, %s70
      %s87 = sphi 0, %s71
      %s93 = sphi 0, %s95
      %s96 = sphi 0, %s93
      %s97 = sphi 0, %s96
      %s113 = sphi 0, %s97
    $region4: #{tpu_custom_call.1} parent=1 // loop_header_branch
      %18 = sbr.rel (%p16) target = $region8
    $region5: #{tpu_custom_call.1} parent=1 // loop_body
      %s20 = ssub.s32 %s15, 1
      %s21 = ssub.s32 %s15, 2
      %s22 = sadd.s32 %s15, 1
      %s24 = sadd.s32 %s23, 1
      %p27 = scmp.eq.s32.totalorder %s15, 3
      %p28 = scmp.ne.s32.totalorder %s23, %s25
      %p29 = scmp.eq.s32.totalorder %s15, 0
      %p30 = por %p28, %p29
      %p31 = scmp.ne.s32.totalorder %s23, %s25
      %p32 = scmp.eq.s32.totalorder %s20, 3
      %p33 = por %p31, %p32
      %p34 = scmp.ne.s32.totalorder %s25, %s26
      %p35 = scmp.eq.s32.totalorder %s20, 0
      %p36 = por %p34, %p35
      %p37 = scmp.ne.s32.totalorder %s25, %s26
      %p38 = scmp.eq.s32.totalorder %s21, 3
      %p39 = por %p37, %p38
      %p41 = scmp.ne.s32.totalorder %s26, %s40
      %p42 = scmp.eq.s32.totalorder %s21, 0
      %p43 = por %p41, %p42
      %s45 = sadd.s32 %s44, 1
      %p48 = scmp.eq.s32.totalorder %s15, 3
      %p49 = scmp.ne.s32.totalorder %s44, %s46
      %p50 = scmp.eq.s32.totalorder %s15, 0
      %p51 = por %p49, %p50
      %p52 = scmp.ne.s32.totalorder %s44, %s46
      %p53 = scmp.eq.s32.totalorder %s20, 3
      %p54 = por %p52, %p53
      %p55 = scmp.ne.s32.totalorder %s46, %s47
      %p56 = scmp.eq.s32.totalorder %s20, 0
      %p57 = por %p55, %p56
      %p58 = scmp.ne.s32.totalorder %s46, %s47
      %p59 = scmp.eq.s32.totalorder %s21, 3
      %p60 = por %p58, %p59
      %p62 = scmp.ne.s32.totalorder %s47, %s61
      %p63 = scmp.eq.s32.totalorder %s21, 0
      %p64 = por %p62, %p63
      %s65 = ssub.s32 %s15, %s22
      %p66 = scmp.eq.s32.totalorder %s65, 0
      %s68 = sadd.s32 %s67, 1
      %s69 = scalar_select %p66, %s67, %s68
      %p72 = pneg %p66
      %p73 = scmp.eq.s32.totalorder %s15, 3
      %p74 = por %p72, %p73
      %p75 = scmp.ne.s32.totalorder %s67, %s70
      %p76 = scmp.eq.s32.totalorder %s15, 0
      %p77 = por %p75, %p76
      %p78 = scmp.ne.s32.totalorder %s67, %s70
      %p79 = scmp.eq.s32.totalorder %s20, 3
      %p80 = por %p78, %p79
      %p81 = scmp.ne.s32.totalorder %s70, %s71
      %p82 = scmp.eq.s32.totalorder %s20, 0
      %p83 = por %p81, %p82
      %p84 = scmp.ne.s32.totalorder %s70, %s71
      %p85 = scmp.eq.s32.totalorder %s21, 3
      %p86 = por %p84, %p85
      %p88 = scmp.ne.s32.totalorder %s71, %s87
      %p89 = scmp.eq.s32.totalorder %s21, 0
      %p90 = por %p88, %p89
      %s91 = ssub.s32 %s15, %s22
      %p92 = scmp.eq.s32.totalorder %s91, 0
      %s94 = sadd.s32 %s93, 1
      %s95 = scalar_select %p92, %s93, %s94
      %p98 = pneg %p92
      %p99 = scmp.eq.s32.totalorder %s15, 3
      %p100 = por %p98, %p99
      %p101 = scmp.ne.s32.totalorder %s93, %s96
      %p102 = scmp.eq.s32.totalorder %s15, 0
      %p103 = por %p101, %p102
      %p104 = scmp.ne.s32.totalorder %s93, %s96
      %p105 = scmp.eq.s32.totalorder %s20, 3
      %p106 = por %p104, %p105
      %p107 = scmp.ne.s32.totalorder %s96, %s97
      %p108 = scmp.eq.s32.totalorder %s20, 0
      %p109 = por %p107, %p108
      %p110 = scmp.ne.s32.totalorder %s96, %s97
      %p111 = scmp.eq.s32.totalorder %s21, 3
      %p112 = por %p110, %p111
      %p114 = scmp.ne.s32.totalorder %s97, %s113
      %p115 = scmp.eq.s32.totalorder %s21, 0
      %p116 = por %p114, %p115
      %p117 = scmp.le.s32.totalorder 1, %s15
      %p118 = scmp.lt.s32.totalorder %s15, 5
      %p119 = pnand %p117, %p118
      %p120 = pneg %p119
      // Predicated region
      $region9: #{tpu_custom_call.1} parent=5 // pred_check
        _
      $region10: #{tpu_custom_call.1} parent=5 // pred_check_branch
        %122 = sbr.rel (%p119) target = $region12
      $region11: #{tpu_custom_call.1} parent=5 // pred_region
        %s123 = ssub.s32 %s15, 1
        // Predicated region
        $region13: #{tpu_custom_call.1} parent=11 // pred_check
          %p124 = pneg %p36
        $region14: #{tpu_custom_call.1} parent=11 // pred_check_branch
          %126 = sbr.rel (%p124) target = $region16
        $region15: #{tpu_custom_call.1} parent=11 // pred_region
          _
        $region16: #{tpu_custom_call.1} parent=11 // pred_fallthru
          _
        // Predicated region
        $region17: #{tpu_custom_call.1} parent=11 // pred_check
          %p127 = pneg %p57
        $region18: #{tpu_custom_call.1} parent=11 // pred_check_branch
          %129 = sbr.rel (%p127) target = $region20
        $region19: #{tpu_custom_call.1} parent=11 // pred_region
          _
        $region20: #{tpu_custom_call.1} parent=11 // pred_fallthru
          _
      $region12: #{tpu_custom_call.1} parent=5 // pred_fallthru
        _
      %p130 = scmp.lt.s32.totalorder %s15, 4
      // Predicated region
      $region21: #{tpu_custom_call.1} parent=5 // pred_check
        %p131 = pneg %p130
      $region22: #{tpu_custom_call.1} parent=5 // pred_check_branch
        %133 = sbr.rel (%p131) target = $region24
      $region23: #{tpu_custom_call.1} parent=5 // pred_region
        // Predicated region
        $region25: #{tpu_custom_call.1} parent=23 // pred_check
          %p134 = pneg %p77
        $region26: #{tpu_custom_call.1} parent=23 // pred_check_branch
          %136 = sbr.rel (%p134) target = $region28
        $region27: #{tpu_custom_call.1} parent=23 // pred_region
          %s137 = sand.u32 %s67, 1
          %s138 = scalar_lea.sflag [#allocation3], %s137
          %s139 = sand.u32 %s67, 1
          %s140 = smul.addr %s139, 128
          %s141 = scalar_lea.vmem [#allocation2], %s140
          %s142 = smul.u32 4, %s15
          %s144 = ssub.s32 2048, 2048
          %145 = vsyncadd %s138, %s144
          %s146 = smul.addr %s142, 128
          %s147 = scalar_lea.hbm %s2, %s146
          %s148 = sshll.u32 %s141, 4
          %s149 = int_to_ptr.vmem [resolvable:$true] %s148
          %154 = dma.hbm_to_vmem [thread:$0]  %s147, 2048, %s149, %s138, 2048, 512, 32
        $region28: #{tpu_custom_call.1} parent=23 // pred_fallthru
          _
      $region24: #{tpu_custom_call.1} parent=5 // pred_fallthru
        _
      %p155 = scmp.le.s32.totalorder 1, %s15
      %p156 = scmp.lt.s32.totalorder %s15, 5
      %p157 = pnand %p155, %p156
      %p158 = pneg %p157
      // Predicated region
      $region29: #{tpu_custom_call.1} parent=5 // pred_check
        _
      $region30: #{tpu_custom_call.1} parent=5 // pred_check_branch
        %160 = sbr.rel (%p157) target = $region32
      $region31: #{tpu_custom_call.1} parent=5 // pred_region
        %s161 = ssub.s32 %s15, 1
        %s162 = sand.u32 %s70, 1
        %s163 = scalar_lea.sflag [#allocation3], %s162
        %s164 = sand.u32 %s70, 1
        %s165 = smul.addr %s164, 128
        %s166 = scalar_lea.vmem [#allocation2], %s165
        // Predicated region
        $region33: #{tpu_custom_call.1} parent=31 // pred_check
          %p167 = pneg %p83
        $region34: #{tpu_custom_call.1} parent=31 // pred_check_branch
          %169 = sbr.rel (%p167) target = $region36
        $region35: #{tpu_custom_call.1} parent=31 // pred_region
          %170 = dma.done %s163, 2048
        $region36: #{tpu_custom_call.1} parent=31 // pred_fallthru
          _
        %p171 = pneg %p36
        %p172 = pneg %p33
        %p173 = pneg %p57
        %p174 = pneg %p54
        %s175 = sand.u32 %s70, 1
        %s176 = scalar_lea.sflag [#allocation3], %s175
        %s177 = sand.u32 %s70, 1
        %s178 = smul.addr %s177, 128
        %s179 = scalar_lea.vmem [#allocation2], %s178
        %p180 = pneg %p83
        %p181 = pneg %p80
        %p182 = pneg %p109
        %p183 = pneg %p106
        %s184 = sand.u32 %s96, 1
        %s185 = scalar_lea.sflag [#allocation4], %s184
        %s186 = sand.u32 %s96, 1
        %s187 = smul.addr %s186, 128
        %s188 = scalar_lea.vmem [#allocation5], %s187
        %s189 = smul.u32 4, %s20
        %s190 = smul.u32 4, %s20
        %v192 = vld [vmem:[%s166] sm:$0xff]
        %v193 = vld [vmem:[%s166 + $0x8] sm:$0xff]
        %v194 = vld [vmem:[%s166 + $0x10] sm:$0xff]
        %v195 = vld [vmem:[%s166 + $0x18] sm:$0xff]
        %v196 = vld [vmem:[%s166 + $0x20] sm:$0xff]
        %v197 = vld [vmem:[%s166 + $0x28] sm:$0xff]
        %v198 = vld [vmem:[%s166 + $0x30] sm:$0xff]
        %v199 = vld [vmem:[%s166 + $0x38] sm:$0xff]
        %v200 = vld [vmem:[%s166 + $0x40] sm:$0xff]
        %v201 = vld [vmem:[%s166 + $0x48] sm:$0xff]
        %v202 = vld [vmem:[%s166 + $0x50] sm:$0xff]
        %v203 = vld [vmem:[%s166 + $0x58] sm:$0xff]
        %v204 = vld [vmem:[%s166 + $0x60] sm:$0xff]
        %v205 = vld [vmem:[%s166 + $0x68] sm:$0xff]
        %v206 = vld [vmem:[%s166 + $0x70] sm:$0xff]
        %v207 = vld [vmem:[%s166 + $0x78] sm:$0xff]
        %208 = vst [vmem:[%s188] sm:$0xff] %v192
        %209 = vst [vmem:[%s188 + $0x8] sm:$0xff] %v193
        %210 = vst [vmem:[%s188 + $0x10] sm:$0xff] %v194
        %211 = vst [vmem:[%s188 + $0x18] sm:$0xff] %v195
        %212 = vst [vmem:[%s188 + $0x20] sm:$0xff] %v196
        %213 = vst [vmem:[%s188 + $0x28] sm:$0xff] %v197
        %214 = vst [vmem:[%s188 + $0x30] sm:$0xff] %v198
        %215 = vst [vmem:[%s188 + $0x38] sm:$0xff] %v199
        %216 = vst [vmem:[%s188 + $0x40] sm:$0xff] %v200
        %217 = vst [vmem:[%s188 + $0x48] sm:$0xff] %v201
        %218 = vst [vmem:[%s188 + $0x50] sm:$0xff] %v202
        %219 = vst [vmem:[%s188 + $0x58] sm:$0xff] %v203
        %220 = vst [vmem:[%s188 + $0x60] sm:$0xff] %v204
        %221 = vst [vmem:[%s188 + $0x68] sm:$0xff] %v205
        %222 = vst [vmem:[%s188 + $0x70] sm:$0xff] %v206
        %223 = vst [vmem:[%s188 + $0x78] sm:$0xff] %v207
        %v224 = vld [vmem:[%s188] sm:$0xff]
        %v225 = vld [vmem:[%s188 + $0x8] sm:$0xff]
        %v226 = vld [vmem:[%s188 + $0x10] sm:$0xff]
        %v227 = vld [vmem:[%s188 + $0x18] sm:$0xff]
        %v228 = vld [vmem:[%s188 + $0x20] sm:$0xff]
        %v229 = vld [vmem:[%s188 + $0x28] sm:$0xff]
        %v230 = vld [vmem:[%s188 + $0x30] sm:$0xff]
        %v231 = vld [vmem:[%s188 + $0x38] sm:$0xff]
        %v232 = vld [vmem:[%s188 + $0x40] sm:$0xff]
        %v233 = vld [vmem:[%s188 + $0x48] sm:$0xff]
        %v234 = vld [vmem:[%s188 + $0x50] sm:$0xff]
        %v235 = vld [vmem:[%s188 + $0x58] sm:$0xff]
        %v236 = vld [vmem:[%s188 + $0x60] sm:$0xff]
        %v237 = vld [vmem:[%s188 + $0x68] sm:$0xff]
        %v238 = vld [vmem:[%s188 + $0x70] sm:$0xff]
        %v239 = vld [vmem:[%s188 + $0x78] sm:$0xff]
        %v240 = vld [vmem:[%s0 + $0x8] sm:$0xff]
        %v241 = vpack.c.bf16 %v240, %v240
        %v242 = vpack.c.bf16 %v228, %v224
        %v243 = vpack.c.bf16 %v229, %v225
        %v244 = vpack.c.bf16 %v230, %v226
        %v245 = vpack.c.bf16 %v231, %v227
        %v246 = vpack.c.bf16 %v236, %v232
        %v247 = vpack.c.bf16 %v237, %v233
        %v248 = vpack.c.bf16 %v238, %v234
        %v249 = vpack.c.bf16 %v239, %v235
        %vm250 = vcmask 261120
        %v252 = vsel %vm250, %v241, 0
        %254 = vmatprep.subr.bf16.mxu0 %v243
        %255 = vmatpush1.bf16.msra.mxu0 %v242
        %256 = vmatprep.subr.bf16.mxu0 %v247
        %257 = vmatpush1.bf16.msra.mxu0 %v246
        %258 = vmatprep.subr.bf16.mxu0 0
        %259 = vmatpush1.bf16.msra.mxu0 0
        %260 = vmatprep.subr.bf16.mxu0 0
        %261 = vmatpush1.bf16.msra.mxu0 0
        %262 = vmatprep.subr.bf16.mxu0 0
        %263 = vmatpush1.bf16.msra.mxu0 0
        %264 = vmatprep.subr.bf16.mxu0 0
        %265 = vmatpush1.bf16.msra.mxu0 0
        %266 = vmatprep.subr.bf16.mxu0 0
        %267 = vmatpush1.bf16.msra.mxu0 0
        %268 = vmatprep.subr.bf16.mxu0 0
        %269 = vmatpush1.bf16.msra.mxu0 0
        %270 = vmatprep.subr.bf16.mxu0 0
        %271 = vmatpush1.bf16.msra.mxu0 0
        %272 = vmatprep.subr.bf16.mxu0 0
        %273 = vmatpush1.bf16.msra.mxu0 0
        %274 = vmatprep.subr.bf16.mxu0 0
        %275 = vmatpush1.bf16.msra.mxu0 0
        %276 = vmatprep.subr.bf16.mxu0 0
        %277 = vmatpush1.bf16.msra.mxu0 0
        %278 = vmatprep.subr.bf16.mxu0 0
        %279 = vmatpush1.bf16.msra.mxu0 0
        %280 = vmatprep.subr.bf16.mxu0 0
        %281 = vmatpush1.bf16.msra.mxu0 0
        %282 = vmatprep.subr.bf16.mxu0 0
        %283 = vmatpush1.bf16.msra.mxu0 0
        %284 = vmatprep.subr.bf16.mxu0 0
        %285 = vmatpush1.bf16.msra.mxu0 0
        %286 = vmatprep.mubr.bf16.mxu0 0
        %287 = vmatmul.mubr.bf16.gmra.mrb[0].mxu0 %v252
        %v288 = vpop.f32.mrb[0].mxu0
        %v289 = vadd.f32 0.0, %v288
        %v290 = vpop.f32.mrb[0].mxu0
        %v291 = vadd.f32 0.0, %v290
        %v292 = vpop.f32.mrb[0].mxu0
        %v293 = vpop.f32.mrb[0].mxu0
        %294 = vdwg.mxu0
        %295 = vmatprep.subr.bf16.mxu0 %v245
        %296 = vmatpush1.bf16.msra.mxu0 %v244
        %297 = vmatprep.subr.bf16.mxu0 %v249
        %298 = vmatpush1.bf16.msra.mxu0 %v248
        %299 = vmatprep.subr.bf16.mxu0 0
        %300 = vmatpush1.bf16.msra.mxu0 0
        %301 = vmatprep.subr.bf16.mxu0 0
        %302 = vmatpush1.bf16.msra.mxu0 0
        %303 = vmatprep.subr.bf16.mxu0 0
        %304 = vmatpush1.bf16.msra.mxu0 0
        %305 = vmatprep.subr.bf16.mxu0 0
        %306 = vmatpush1.bf16.msra.mxu0 0
        %307 = vmatprep.subr.bf16.mxu0 0
        %308 = vmatpush1.bf16.msra.mxu0 0
        %309 = vmatprep.subr.bf16.mxu0 0
        %310 = vmatpush1.bf16.msra.mxu0 0
        %311 = vmatprep.subr.bf16.mxu0 0
        %312 = vmatpush1.bf16.msra.mxu0 0
        %313 = vmatprep.subr.bf16.mxu0 0
        %314 = vmatpush1.bf16.msra.mxu0 0
        %315 = vmatprep.subr.bf16.mxu0 0
        %316 = vmatpush1.bf16.msra.mxu0 0
        %317 = vmatprep.subr.bf16.mxu0 0
        %318 = vmatpush1.bf16.msra.mxu0 0
        %319 = vmatprep.subr.bf16.mxu0 0
        %320 = vmatpush1.bf16.msra.mxu0 0
        %321 = vmatprep.subr.bf16.mxu0 0
        %322 = vmatpush1.bf16.msra.mxu0 0
        %323 = vmatprep.subr.bf16.mxu0 0
        %324 = vmatpush1.bf16.msra.mxu0 0
        %325 = vmatprep.subr.bf16.mxu0 0
        %326 = vmatpush1.bf16.msra.mxu0 0
        %327 = vmatprep.mubr.bf16.mxu0 0
        %328 = vmatmul.mubr.bf16.gmra.mrb[0].mxu0 %v252
        %v329 = vpop.f32.mrb[0].mxu0
        %v330 = vadd.f32 0.0, %v329
        %v331 = vpop.f32.mrb[0].mxu0
        %v332 = vadd.f32 0.0, %v331
        %v333 = vpop.f32.mrb[0].mxu0
        %v334 = vpop.f32.mrb[0].mxu0
        %335 = vdwg.mxu0
        %v336 = vcvt.f32.s32.to.zero.pseudo %v289
        %v337 = vcvt.f32.s32.to.zero.pseudo %v291
        %v338 = vcvt.f32.s32.to.zero.pseudo %v330
        %v339 = vcvt.f32.s32.to.zero.pseudo %v332
        %vm340 = vcmp.gt.s32.totalorder %v336, 0
        %v341 = vsel %vm340, %v336, 0
        %vm342 = vcmp.gt.s32.totalorder %v337, 0
        %v343 = vsel %vm342, %v337, 0
        %vm344 = vcmp.gt.s32.totalorder %v338, 0
        %v345 = vsel %vm344, %v338, 0
        %vm346 = vcmp.gt.s32.totalorder %v339, 0
        %v347 = vsel %vm346, %v339, 0
        %vm348 = vcmp.lt.s32.totalorder %v341, 3
        %v349 = vsel %vm348, %v341, 3
        %vm350 = vcmp.lt.s32.totalorder %v343, 3
        %v351 = vsel %vm350, %v343, 3
        %vm352 = vcmp.lt.s32.totalorder %v345, 3
        %v353 = vsel %vm352, %v345, 3
        %vm354 = vcmp.lt.s32.totalorder %v347, 3
        %v355 = vsel %vm354, %v347, 3
        %v356 = vld [vmem:[%s1 + $0x8] sm:$0xff]
        %357 = vset.pattern.permute.xlu0 0
        %358 = vperm.xlu0 %357, %v356
        %v359 = vpop.permute.xlu0 %358
        %v360 = vshra.s32 %v359, %v349
        %v361 = vshra.s32 %v359, %v351
        %v362 = vshra.s32 %v359, %v353
        %v363 = vshra.s32 %v359, %v355
        %v364 = vand.u32 %v360, 1
        %v365 = vand.u32 %v361, 1
        %v366 = vand.u32 %v362, 1
        %v367 = vand.u32 %v363, 1
        %v368 = vcvt.s32.f32 %v364
        %v369 = vcvt.s32.f32 %v365
        %v370 = vcvt.s32.f32 %v366
        %v371 = vcvt.s32.f32 %v367
        %372 = vst [vmem:[%s188 + $0x20] sm:$0xff] %v368
        %373 = vst [vmem:[%s188 + $0x28] sm:$0xff] %v369
        %374 = vst [vmem:[%s188 + $0x30] sm:$0xff] %v370
        %375 = vst [vmem:[%s188 + $0x38] sm:$0xff] %v371
        %v376 = vld [vmem:[%s188] sm:$0xff]
        %v377 = vld [vmem:[%s188 + $0x8] sm:$0xff]
        %v378 = vld [vmem:[%s188 + $0x10] sm:$0xff]
        %v379 = vld [vmem:[%s188 + $0x18] sm:$0xff]
        %v380 = vld [vmem:[%s188 + $0x20] sm:$0xff]
        %v381 = vld [vmem:[%s188 + $0x28] sm:$0xff]
        %v382 = vld [vmem:[%s188 + $0x30] sm:$0xff]
        %v383 = vld [vmem:[%s188 + $0x38] sm:$0xff]
        %v384 = vld [vmem:[%s188 + $0x40] sm:$0xff]
        %v385 = vld [vmem:[%s188 + $0x48] sm:$0xff]
        %v386 = vld [vmem:[%s188 + $0x50] sm:$0xff]
        %v387 = vld [vmem:[%s188 + $0x58] sm:$0xff]
        %v388 = vld [vmem:[%s188 + $0x60] sm:$0xff]
        %v389 = vld [vmem:[%s188 + $0x68] sm:$0xff]
        %v390 = vld [vmem:[%s188 + $0x70] sm:$0xff]
        %v391 = vld [vmem:[%s188 + $0x78] sm:$0xff]
        %v392 = vld [vmem:[%s0 + $0x10] sm:$0xff]
        %v393 = vpack.c.bf16 %v392, %v392
        %v394 = vpack.c.bf16 %v380, %v376
        %v395 = vpack.c.bf16 %v381, %v377
        %v396 = vpack.c.bf16 %v382, %v378
        %v397 = vpack.c.bf16 %v383, %v379
        %v398 = vpack.c.bf16 %v388, %v384
        %v399 = vpack.c.bf16 %v389, %v385
        %v400 = vpack.c.bf16 %v390, %v386
        %v401 = vpack.c.bf16 %v391, %v387
        %v403 = vsel %vm250, %v393, 0
        %405 = vmatprep.subr.bf16.mxu0 %v395
        %406 = vmatpush1.bf16.msra.mxu0 %v394
        %407 = vmatprep.subr.bf16.mxu0 %v399
        %408 = vmatpush1.bf16.msra.mxu0 %v398
        %409 = vmatprep.subr.bf16.mxu0 0
        %410 = vmatpush1.bf16.msra.mxu0 0
        %411 = vmatprep.subr.bf16.mxu0 0
        %412 = vmatpush1.bf16.msra.mxu0 0
        %413 = vmatprep.subr.bf16.mxu0 0
        %414 = vmatpush1.bf16.msra.mxu0 0
        %415 = vmatprep.subr.bf16.mxu0 0
        %416 = vmatpush1.bf16.msra.mxu0 0
        %417 = vmatprep.subr.bf16.mxu0 0
        %418 = vmatpush1.bf16.msra.mxu0 0
        %419 = vmatprep.subr.bf16.mxu0 0
        %420 = vmatpush1.bf16.msra.mxu0 0
        %421 = vmatprep.subr.bf16.mxu0 0
        %422 = vmatpush1.bf16.msra.mxu0 0
        %423 = vmatprep.subr.bf16.mxu0 0
        %424 = vmatpush1.bf16.msra.mxu0 0
        %425 = vmatprep.subr.bf16.mxu0 0
        %426 = vmatpush1.bf16.msra.mxu0 0
        %427 = vmatprep.subr.bf16.mxu0 0
        %428 = vmatpush1.bf16.msra.mxu0 0
        %429 = vmatprep.subr.bf16.mxu0 0
        %430 = vmatpush1.bf16.msra.mxu0 0
        %431 = vmatprep.subr.bf16.mxu0 0
        %432 = vmatpush1.bf16.msra.mxu0 0
        %433 = vmatprep.subr.bf16.mxu0 0
        %434 = vmatpush1.bf16.msra.mxu0 0
        %435 = vmatprep.subr.bf16.mxu0 0
        %436 = vmatpush1.bf16.msra.mxu0 0
        %437 = vmatprep.mubr.bf16.mxu0 0
        %438 = vmatmul.mubr.bf16.gmra.mrb[0].mxu0 %v403
        %v439 = vpop.f32.mrb[0].mxu0
        %v440 = vadd.f32 0.0, %v439
        %v441 = vpop.f32.mrb[0].mxu0
        %v442 = vadd.f32 0.0, %v441
        %v443 = vpop.f32.mrb[0].mxu0
        %v444 = vpop.f32.mrb[0].mxu0
        %445 = vdwg.mxu0
        %446 = vmatprep.subr.bf16.mxu0 %v397
        %447 = vmatpush1.bf16.msra.mxu0 %v396
        %448 = vmatprep.subr.bf16.mxu0 %v401
        %449 = vmatpush1.bf16.msra.mxu0 %v400
        %450 = vmatprep.subr.bf16.mxu0 0
        %451 = vmatpush1.bf16.msra.mxu0 0
        %452 = vmatprep.subr.bf16.mxu0 0
        %453 = vmatpush1.bf16.msra.mxu0 0
        %454 = vmatprep.subr.bf16.mxu0 0
        %455 = vmatpush1.bf16.msra.mxu0 0
        %456 = vmatprep.subr.bf16.mxu0 0
        %457 = vmatpush1.bf16.msra.mxu0 0
        %458 = vmatprep.subr.bf16.mxu0 0
        %459 = vmatpush1.bf16.msra.mxu0 0
        %460 = vmatprep.subr.bf16.mxu0 0
        %461 = vmatpush1.bf16.msra.mxu0 0
        %462 = vmatprep.subr.bf16.mxu0 0
        %463 = vmatpush1.bf16.msra.mxu0 0
        %464 = vmatprep.subr.bf16.mxu0 0
        %465 = vmatpush1.bf16.msra.mxu0 0
        %466 = vmatprep.subr.bf16.mxu0 0
        %467 = vmatpush1.bf16.msra.mxu0 0
        %468 = vmatprep.subr.bf16.mxu0 0
        %469 = vmatpush1.bf16.msra.mxu0 0
        %470 = vmatprep.subr.bf16.mxu0 0
        %471 = vmatpush1.bf16.msra.mxu0 0
        %472 = vmatprep.subr.bf16.mxu0 0
        %473 = vmatpush1.bf16.msra.mxu0 0
        %474 = vmatprep.subr.bf16.mxu0 0
        %475 = vmatpush1.bf16.msra.mxu0 0
        %476 = vmatprep.subr.bf16.mxu0 0
        %477 = vmatpush1.bf16.msra.mxu0 0
        %478 = vmatprep.mubr.bf16.mxu0 0
        %479 = vmatmul.mubr.bf16.gmra.mrb[0].mxu0 %v403
        %v480 = vpop.f32.mrb[0].mxu0
        %v481 = vadd.f32 0.0, %v480
        %v482 = vpop.f32.mrb[0].mxu0
        %v483 = vadd.f32 0.0, %v482
        %v484 = vpop.f32.mrb[0].mxu0
        %v485 = vpop.f32.mrb[0].mxu0
        %486 = vdwg.mxu0
        %v487 = vcvt.f32.s32.to.zero.pseudo %v440
        %v488 = vcvt.f32.s32.to.zero.pseudo %v442
        %v489 = vcvt.f32.s32.to.zero.pseudo %v481
        %v490 = vcvt.f32.s32.to.zero.pseudo %v483
        %vm491 = vcmp.gt.s32.totalorder %v487, 0
        %v492 = vsel %vm491, %v487, 0
        %vm493 = vcmp.gt.s32.totalorder %v488, 0
        %v494 = vsel %vm493, %v488, 0
        %vm495 = vcmp.gt.s32.totalorder %v489, 0
        %v496 = vsel %vm495, %v489, 0
        %vm497 = vcmp.gt.s32.totalorder %v490, 0
        %v498 = vsel %vm497, %v490, 0
        %vm499 = vcmp.lt.s32.totalorder %v492, 3
        %v500 = vsel %vm499, %v492, 3
        %vm501 = vcmp.lt.s32.totalorder %v494, 3
        %v502 = vsel %vm501, %v494, 3
        %vm503 = vcmp.lt.s32.totalorder %v496, 3
        %v504 = vsel %vm503, %v496, 3
        %vm505 = vcmp.lt.s32.totalorder %v498, 3
        %v506 = vsel %vm505, %v498, 3
        %v507 = vld [vmem:[%s1 + $0x10] sm:$0xff]
        %508 = vset.pattern.permute.xlu0 0
        %509 = vperm.xlu0 %508, %v507
        %v510 = vpop.permute.xlu0 %509
        %v511 = vshra.s32 %v510, %v500
        %v512 = vshra.s32 %v510, %v502
        %v513 = vshra.s32 %v510, %v504
        %v514 = vshra.s32 %v510, %v506
        %v515 = vand.u32 %v511, 1
        %v516 = vand.u32 %v512, 1
        %v517 = vand.u32 %v513, 1
        %v518 = vand.u32 %v514, 1
        %v519 = vcvt.s32.f32 %v515
        %v520 = vcvt.s32.f32 %v516
        %v521 = vcvt.s32.f32 %v517
        %v522 = vcvt.s32.f32 %v518
        %523 = vst [vmem:[%s188 + $0x40] sm:$0xff] %v519
        %524 = vst [vmem:[%s188 + $0x48] sm:$0xff] %v520
        %525 = vst [vmem:[%s188 + $0x50] sm:$0xff] %v521
        %526 = vst [vmem:[%s188 + $0x58] sm:$0xff] %v522
        %v527 = vld [vmem:[%s188] sm:$0xff]
        %v528 = vld [vmem:[%s188 + $0x8] sm:$0xff]
        %v529 = vld [vmem:[%s188 + $0x10] sm:$0xff]
        %v530 = vld [vmem:[%s188 + $0x18] sm:$0xff]
        %v531 = vld [vmem:[%s188 + $0x20] sm:$0xff]
        %v532 = vld [vmem:[%s188 + $0x28] sm:$0xff]
        %v533 = vld [vmem:[%s188 + $0x30] sm:$0xff]
        %v534 = vld [vmem:[%s188 + $0x38] sm:$0xff]
        %v535 = vld [vmem:[%s188 + $0x40] sm:$0xff]
        %v536 = vld [vmem:[%s188 + $0x48] sm:$0xff]
        %v537 = vld [vmem:[%s188 + $0x50] sm:$0xff]
        %v538 = vld [vmem:[%s188 + $0x58] sm:$0xff]
        %v539 = vld [vmem:[%s188 + $0x60] sm:$0xff]
        %v540 = vld [vmem:[%s188 + $0x68] sm:$0xff]
        %v541 = vld [vmem:[%s188 + $0x70] sm:$0xff]
        %v542 = vld [vmem:[%s188 + $0x78] sm:$0xff]
        %v543 = vld [vmem:[%s0 + $0x18] sm:$0xff]
        %v544 = vpack.c.bf16 %v543, %v543
        %v545 = vpack.c.bf16 %v531, %v527
        %v546 = vpack.c.bf16 %v532, %v528
        %v547 = vpack.c.bf16 %v533, %v529
        %v548 = vpack.c.bf16 %v534, %v530
        %v549 = vpack.c.bf16 %v539, %v535
        %v550 = vpack.c.bf16 %v540, %v536
        %v551 = vpack.c.bf16 %v541, %v537
        %v552 = vpack.c.bf16 %v542, %v538
        %v554 = vsel %vm250, %v544, 0
        %556 = vmatprep.subr.bf16.mxu0 %v546
        %557 = vmatpush1.bf16.msra.mxu0 %v545
        %558 = vmatprep.subr.bf16.mxu0 %v550
        %559 = vmatpush1.bf16.msra.mxu0 %v549
        %560 = vmatprep.subr.bf16.mxu0 0
        %561 = vmatpush1.bf16.msra.mxu0 0
        %562 = vmatprep.subr.bf16.mxu0 0
        %563 = vmatpush1.bf16.msra.mxu0 0
        %564 = vmatprep.subr.bf16.mxu0 0
        %565 = vmatpush1.bf16.msra.mxu0 0
        %566 = vmatprep.subr.bf16.mxu0 0
        %567 = vmatpush1.bf16.msra.mxu0 0
        %568 = vmatprep.subr.bf16.mxu0 0
        %569 = vmatpush1.bf16.msra.mxu0 0
        %570 = vmatprep.subr.bf16.mxu0 0
        %571 = vmatpush1.bf16.msra.mxu0 0
        %572 = vmatprep.subr.bf16.mxu0 0
        %573 = vmatpush1.bf16.msra.mxu0 0
        %574 = vmatprep.subr.bf16.mxu0 0
        %575 = vmatpush1.bf16.msra.mxu0 0
        %576 = vmatprep.subr.bf16.mxu0 0
        %577 = vmatpush1.bf16.msra.mxu0 0
        %578 = vmatprep.subr.bf16.mxu0 0
        %579 = vmatpush1.bf16.msra.mxu0 0
        %580 = vmatprep.subr.bf16.mxu0 0
        %581 = vmatpush1.bf16.msra.mxu0 0
        %582 = vmatprep.subr.bf16.mxu0 0
        %583 = vmatpush1.bf16.msra.mxu0 0
        %584 = vmatprep.subr.bf16.mxu0 0
        %585 = vmatpush1.bf16.msra.mxu0 0
        %586 = vmatprep.subr.bf16.mxu0 0
        %587 = vmatpush1.bf16.msra.mxu0 0
        %588 = vmatprep.mubr.bf16.mxu0 0
        %589 = vmatmul.mubr.bf16.gmra.mrb[0].mxu0 %v554
        %v590 = vpop.f32.mrb[0].mxu0
        %v591 = vadd.f32 0.0, %v590
        %v592 = vpop.f32.mrb[0].mxu0
        %v593 = vadd.f32 0.0, %v592
        %v594 = vpop.f32.mrb[0].mxu0
        %v595 = vpop.f32.mrb[0].mxu0
        %596 = vdwg.mxu0
        %597 = vmatprep.subr.bf16.mxu0 %v548
        %598 = vmatpush1.bf16.msra.mxu0 %v547
        %599 = vmatprep.subr.bf16.mxu0 %v552
        %600 = vmatpush1.bf16.msra.mxu0 %v551
        %601 = vmatprep.subr.bf16.mxu0 0
        %602 = vmatpush1.bf16.msra.mxu0 0
        %603 = vmatprep.subr.bf16.mxu0 0
        %604 = vmatpush1.bf16.msra.mxu0 0
        %605 = vmatprep.subr.bf16.mxu0 0
        %606 = vmatpush1.bf16.msra.mxu0 0
        %607 = vmatprep.subr.bf16.mxu0 0
        %608 = vmatpush1.bf16.msra.mxu0 0
        %609 = vmatprep.subr.bf16.mxu0 0
        %610 = vmatpush1.bf16.msra.mxu0 0
        %611 = vmatprep.subr.bf16.mxu0 0
        %612 = vmatpush1.bf16.msra.mxu0 0
        %613 = vmatprep.subr.bf16.mxu0 0
        %614 = vmatpush1.bf16.msra.mxu0 0
        %615 = vmatprep.subr.bf16.mxu0 0
        %616 = vmatpush1.bf16.msra.mxu0 0
        %617 = vmatprep.subr.bf16.mxu0 0
        %618 = vmatpush1.bf16.msra.mxu0 0
        %619 = vmatprep.subr.bf16.mxu0 0
        %620 = vmatpush1.bf16.msra.mxu0 0
        %621 = vmatprep.subr.bf16.mxu0 0
        %622 = vmatpush1.bf16.msra.mxu0 0
        %623 = vmatprep.subr.bf16.mxu0 0
        %624 = vmatpush1.bf16.msra.mxu0 0
        %625 = vmatprep.subr.bf16.mxu0 0
        %626 = vmatpush1.bf16.msra.mxu0 0
        %627 = vmatprep.subr.bf16.mxu0 0
        %628 = vmatpush1.bf16.msra.mxu0 0
        %629 = vmatprep.mubr.bf16.mxu0 0
        %630 = vmatmul.mubr.bf16.gmra.mrb[0].mxu0 %v554
        %v631 = vpop.f32.mrb[0].mxu0
        %v632 = vadd.f32 0.0, %v631
        %v633 = vpop.f32.mrb[0].mxu0
        %v634 = vadd.f32 0.0, %v633
        %v635 = vpop.f32.mrb[0].mxu0
        %v636 = vpop.f32.mrb[0].mxu0
        %637 = vdwg.mxu0
        %v638 = vcvt.f32.s32.to.zero.pseudo %v591
        %v639 = vcvt.f32.s32.to.zero.pseudo %v593
        %v640 = vcvt.f32.s32.to.zero.pseudo %v632
        %v641 = vcvt.f32.s32.to.zero.pseudo %v634
        %vm642 = vcmp.gt.s32.totalorder %v638, 0
        %v643 = vsel %vm642, %v638, 0
        %vm644 = vcmp.gt.s32.totalorder %v639, 0
        %v645 = vsel %vm644, %v639, 0
        %vm646 = vcmp.gt.s32.totalorder %v640, 0
        %v647 = vsel %vm646, %v640, 0
        %vm648 = vcmp.gt.s32.totalorder %v641, 0
        %v649 = vsel %vm648, %v641, 0
        %vm650 = vcmp.lt.s32.totalorder %v643, 3
        %v651 = vsel %vm650, %v643, 3
        %vm652 = vcmp.lt.s32.totalorder %v645, 3
        %v653 = vsel %vm652, %v645, 3
        %vm654 = vcmp.lt.s32.totalorder %v647, 3
        %v655 = vsel %vm654, %v647, 3
        %vm656 = vcmp.lt.s32.totalorder %v649, 3
        %v657 = vsel %vm656, %v649, 3
        %v658 = vld [vmem:[%s1 + $0x18] sm:$0xff]
        %659 = vset.pattern.permute.xlu0 0
        %660 = vperm.xlu0 %659, %v658
        %v661 = vpop.permute.xlu0 %660
        %v662 = vshra.s32 %v661, %v651
        %v663 = vshra.s32 %v661, %v653
        %v664 = vshra.s32 %v661, %v655
        %v665 = vshra.s32 %v661, %v657
        %v666 = vand.u32 %v662, 1
        %v667 = vand.u32 %v663, 1
        %v668 = vand.u32 %v664, 1
        %v669 = vand.u32 %v665, 1
        %v670 = vcvt.s32.f32 %v666
        %v671 = vcvt.s32.f32 %v667
        %v672 = vcvt.s32.f32 %v668
        %v673 = vcvt.s32.f32 %v669
        %674 = vst [vmem:[%s188 + $0x60] sm:$0xff] %v670
        %675 = vst [vmem:[%s188 + $0x68] sm:$0xff] %v671
        %676 = vst [vmem:[%s188 + $0x70] sm:$0xff] %v672
        %677 = vst [vmem:[%s188 + $0x78] sm:$0xff] %v673
        %s678 = sand.u32 %s96, 1
        %s679 = scalar_lea.sflag [#allocation4], %s678
        %s680 = sand.u32 %s96, 1
        %s681 = smul.addr %s680, 128
        %s682 = scalar_lea.vmem [#allocation5], %s681
        // Predicated region
        $region37: #{tpu_custom_call.1} parent=31 // pred_check
          %p683 = pneg %p106
        $region38: #{tpu_custom_call.1} parent=31 // pred_check_branch
          %685 = sbr.rel (%p683) target = $region40
        $region39: #{tpu_custom_call.1} parent=31 // pred_region
          %s686 = smul.u32 4, %s20
          %s688 = ssub.s32 2048, 2048
          %689 = vsyncadd %s679, %s688
          %s690 = smul.addr %s686, 128
          %s691 = scalar_lea.hbm %s3, %s690
          %s692 = sshll.u32 %s682, 4
          %s693 = int_to_ptr.vmem [resolvable:$true] %s692
          %698 = dma.vmem_to_hbm [thread:$0]  %s693, 2048, %s691, %s679, 512, 2048, 32
        $region40: #{tpu_custom_call.1} parent=31 // pred_fallthru
          _
      $region32: #{tpu_custom_call.1} parent=5 // pred_fallthru
        _
      %p699 = scmp.le.s32.totalorder 2, %s15
      // Predicated region
      $region41: #{tpu_custom_call.1} parent=5 // pred_check
        %p700 = pneg %p699
      $region42: #{tpu_custom_call.1} parent=5 // pred_check_branch
        %702 = sbr.rel (%p700) target = $region44
      $region43: #{tpu_custom_call.1} parent=5 // pred_region
        %s703 = ssub.s32 %s15, 2
        // Predicated region
        $region45: #{tpu_custom_call.1} parent=43 // pred_check
          %p704 = pneg %p112
        $region46: #{tpu_custom_call.1} parent=43 // pred_check_branch
          %706 = sbr.rel (%p704) target = $region48
        $region47: #{tpu_custom_call.1} parent=43 // pred_region
          %s707 = sand.u32 %s97, 1
          %s708 = scalar_lea.sflag [#allocation4], %s707
          %s709 = sand.u32 %s97, 1
          %s710 = smul.addr %s709, 128
          %s711 = scalar_lea.vmem [#allocation5], %s710
          %712 = dma.done %s708, 2048
        $region48: #{tpu_custom_call.1} parent=43 // pred_fallthru
          _
      $region44: #{tpu_custom_call.1} parent=5 // pred_fallthru
        _
    $region6: #{tpu_custom_call.1} parent=1 // loop_footer
      %s19 = sadd.s32 1, %s15
    $region7: #{tpu_custom_call.1} parent=1 // loop_footer_branch
      %14 = sbr.rel target = $region3
    $region8: #{tpu_custom_call.1} parent=1 // loop_exit
      _
    %713 = vsyncpa [#allocation3], 1
    %s714 = scalar_lea.sflag [#allocation3], 1
    %715 = vsyncpa %s714, 1
    %716 = vsyncpa [#allocation4], 1
    %s717 = scalar_lea.sflag [#allocation4], 1
    %718 = vsyncpa %s717, 1

</llo_original>
